<compile_context>
chip_gen: v5e
topology: v5e:2x2
jax: 0.10.0
libtpu: 0.0.40
codegen_flags: <defaults>
</compile_context>

<pallas_src>
import functools
import math

import jax
import jax.numpy as jnp
from jax.experimental import pallas as pl
from jax.experimental.pallas import tpu as pltpu


# ----------------------------- fused pooling + projection + head kernel --------------
def _fused_kernel(x_ref, ew_ref, b_ref, o_ref, *, bn_tile, C, T, tw, LS, hh, F):
    """One grid step: `bn_tile` (b,n) samples, everything fused.

    x_ref : (bn_tile*C*T, tw, LS*hh, PW)  rows=(bn,c,t,dt,x,hp), lanes = packed (p, w)
    ew_ref: (C*PW, LS*F)   fused weight: 1[lane in w-window y] * w_proj[c,f] / window
    b_ref : (1, LS*F)      bias tiled over the LS w-windows
    o_ref : (bn_tile, 1, F)
    """
    PW = x_ref.shape[-1]
    x = x_ref[...]                                            # (bnCT, tw, LS*hh, PW)

    # --- backbone pooling: big reductions while the lane dim is 128-wide (VPU) -------
    s1 = jnp.sum(x, axis=1)                                   # tw sum   -> (bnCT, LS*hh, PW)
    s2 = s1.reshape(bn_tile * C, T * LS, hh, PW)              # layout-free row relabel
    q = jnp.sum(s2, axis=2)                                   # sh sum   -> (bnC, T*LS, PW)
    # q has only bn_tile*C*T*LS rows (tiny); all heavy traffic is done, lanes dense.

    ew = ew_ref[...]                                          # (C*PW, LS*F)
    bias = b_ref[...]                                         # (1, LS*F)
    scale = 1.0 / float(T * LS * LS)

    outs = []
    for b in range(bn_tile):                                  # bn_tile == 1 in practice
        parts = [q[b * C + c] for c in range(C)]              # leading-dim index (no copy)
        lhs = parts[0] if C == 1 else jnp.concatenate(parts, axis=-1)   # (T*LS, C*PW)
        # single MXU matmul: w-window pooling + channel projection (K=C*PW, N=LS*F)
        feat = jnp.dot(lhs, ew, preferred_element_type=jnp.float32)     # (T*LS, LS*F)
        act = jnp.maximum(feat + bias, 0.0)                   # backbone bias + ReLU
        # head: temporal + spatial average (2nd ReLU of the reference is a no-op >= 0)
        hsum = jnp.sum(act, axis=0, keepdims=True)            # sum over (t, x) rows
        acc = hsum[:, 0:F]
        for y in range(1, LS):                                # LS-1 adds of aligned lane tiles
            acc = acc + hsum[:, y * F:(y + 1) * F]
        outs.append(acc * scale)                              # (1, F)

    res = outs[0] if bn_tile == 1 else jnp.concatenate(outs, axis=0)    # (bn_tile, F)
    o_ref[...] = jnp.reshape(res, (bn_tile, 1, F)).astype(o_ref.dtype)


# ----------------------------- tiling / VMEM helpers ----------------------------------
def _vmem_limit_bytes():
    cap = None
    try:
        info = pltpu.get_tpu_info()
        cap = getattr(info, "vmem_capacity_bytes", None)
    except Exception:
        cap = None
    if not cap:
        cap = 64 * 1024 * 1024          # assume the smallest (v7x per-TC) when unknown
    return int(min(32 * 1024 * 1024, cap // 2))


def _choose_bn_tile(BN, per_bn_bytes, max_tile_bytes, min_tile_bytes=512 * 1024):
    """Smallest BN divisor past the HBM-roofline knee, keeping >=~4 grid steps."""
    if per_bn_bytes > max_tile_bytes:
        # TODO(synk): split SL/H onto an extra grid axis for very large inputs.
        raise ValueError(
            "one (b,n) input slice (%d B) exceeds the per-step VMEM budget (%d B)"
            % (per_bn_bytes, max_tile_bytes))
    tile = 1
    for d in range(1, BN + 1):
        if BN % d:
            continue
        if d * per_bn_bytes > max_tile_bytes:
            break
        tile = d
        # stop once the input block is past the DMA-efficiency knee, or once growing
        # further would leave fewer than ~4 pipelined steps (>=2 per TC on 2-TC chips).
        if d * per_bn_bytes >= min_tile_bytes or BN // d <= 4:
            break
    return tile


def _fused_forward(x4d, ew, bias_tiled, *, BN, bn_tile, C, T, tw, LS, hh, PW, F,
                   vmem_limit):
    LSF = LS * F
    kernel = functools.partial(_fused_kernel, bn_tile=bn_tile, C=C, T=T, tw=tw,
                               LS=LS, hh=hh, F=F)
    in_bytes = BN * C * T * tw * LS * hh * PW * 4
    cost = pl.CostEstimate(
        flops=in_bytes // 4 + 2 * BN * (T * LS) * (C * PW) * LSF,
        transcendentals=0,
        bytes_accessed=in_bytes + int(ew.size) * 4 + int(bias_tiled.size) * 4
        + BN * F * 4,
    )
    return pl.pallas_call(
        kernel,
        out_shape=jax.ShapeDtypeStruct((BN, 1, F), jnp.float32),
        grid=(BN // bn_tile,),
        in_specs=[
            pl.BlockSpec((bn_tile * C * T, tw, LS * hh, PW), lambda i: (i, 0, 0, 0)),
            pl.BlockSpec((C * PW, LSF), lambda i: (0, 0)),
            pl.BlockSpec((1, LSF), lambda i: (0, 0)),
        ],
        out_specs=pl.BlockSpec((bn_tile, 1, F), lambda i: (i, 0, 0)),
        compiler_params=pltpu.CompilerParams(
            dimension_semantics=("parallel",),
            vmem_limit_bytes=vmem_limit,
        ),
        cost_estimate=cost,
    )(x4d, ew, bias_tiled)


# ----------------------------- Module wrapper ----------------------------------------
class ModelVisualizePallas:
    """feature_type='F', pool='avg', network='resnet18' path of model_visualize."""

    def __init__(self, sample_size, num_seq=5, seq_len=5, network="resnet18",
                 feature_type="F", pool="avg", in_channels=3, feature_size=128):
        assert feature_type == "F" and pool == "avg"
        self.sample_size = sample_size
        self.num_seq = num_seq
        self.seq_len = seq_len
        self.feature_size = feature_size
        self.in_channels = in_channels
        if network in ("resnet8", "resnet10"):
            self.last_duration = int(math.ceil(seq_len / 2))
        else:
            self.last_duration = int(math.ceil(seq_len / 4))
        self.last_size = int(math.ceil(sample_size / 32))

        T, LS, F, C = self.last_duration, self.last_size, feature_size, in_channels
        assert seq_len % T == 0, "proxy backbone needs seq_len % last_duration == 0"
        assert sample_size % LS == 0, "proxy backbone needs sample_size % last_size == 0"
        assert F % 128 == 0, "feature_size must be a multiple of 128 (lane-dense)"
        self.tw = seq_len // T
        self.sh = sample_size // LS          # square input -> sh == sw
        self.sw = self.sh
        assert self.sh % 8 == 0, "sublane-aligned spatial windows"

        # Lane packing: fold `pack` h-rows into one 128-lane vreg row when W < 128.
        W = sample_size
        pack = 128 // W if (W < 128 and 128 % W == 0) else 1
        if pack > 1 and (self.sh % pack != 0 or (self.sh // pack) % 8 != 0):
            pack = 1
        self.pack = pack
        self.hh = self.sh // pack            # packed h rows per spatial window
        self.pw = W * pack                   # packed lane width (128 for W=64)

        # Deterministic synthetic backbone parameters (1x1x1 conv C -> F, zero bias).
        key = jax.random.PRNGKey(666)
        self.w_proj = (jax.random.normal(key, (C, F), dtype=jnp.float32)
                       / jnp.sqrt(jnp.float32(C)))
        self.bias_vec = jnp.zeros((F,), dtype=jnp.float32)

        # Fused matmul weight, built once:
        #   ew[(c, l), (y, f)] = 1[lane l in w-window y] * w_proj[c, f] / window
        window = self.tw * self.sh * self.sw
        lane = jnp.arange(self.pw)
        y_of_l = (lane % W) // self.sw                                   # (PW,)
        onehot = (y_of_l[:, None] == jnp.arange(LS)[None, :]).astype(jnp.float32)
        ew = jnp.einsum("ly,cf->clyf", onehot, self.w_proj) / jnp.float32(window)
        self.ew = ew.reshape(C * self.pw, LS * F)                        # (C*PW, LS*F)
        self.bias_tiled = jnp.tile(self.bias_vec[None, :], (1, LS))      # (1, LS*F)

    def forward(self, block):
        B, N, C, SL, H, W = block.shape
        assert C == self.in_channels and SL == self.seq_len
        assert H == self.sample_size and W == self.sample_size
        BN = B * N
        T, LS, F = self.last_duration, self.last_size, self.feature_size
        tw, hh, pack, PW = self.tw, self.hh, self.pack, self.pw
        HP = H // pack

        # Free contiguous view (no transpose / no HBM copy), 128-lane packed rows.
        x4d = block.reshape(BN * C * T, tw, LS * hh, PW)

        per_bn_bytes = C * SL * HP * PW * 4          # exact: input is lane-dense now
        vmem_limit = _vmem_limit_bytes()
        bn_tile = _choose_bn_tile(BN, per_bn_bytes, max_tile_bytes=vmem_limit // 4)

        out = _fused_forward(x4d, self.ew, self.bias_tiled,
                             BN=BN, bn_tile=bn_tile, C=C, T=T, tw=tw, LS=LS, hh=hh,
                             PW=PW, F=F, vmem_limit=vmem_limit)          # (BN, 1, F)
        return out.reshape(B, N, F)


# ----------------------------- reference (plain jnp) ----------------------------------
def _reference(block, model):
    B, N, C, SL, H, W = block.shape
    T, LS, F = model.last_duration, model.last_size, model.feature_size
    tw, sh, sw = SL // T, H // LS, W // LS
    x = block.reshape(B * N, C, T, tw, LS, sh, LS, sw)
    pooled = x.mean(axis=(3, 5, 7))                                      # (BN, C, T, LS, LS)
    feat = jnp.einsum("bctxy,cf->btxyf", pooled, model.w_proj) + model.bias_vec
    feat = jnp.maximum(feat, 0.0)                                        # backbone ReLU
    feat = jnp.maximum(jnp.mean(feat, axis=1), 0.0)                      # temporal avg + relu
    out = jnp.mean(feat, axis=(1, 2))                                    # spatial avg
    return out.reshape(B, N, F)


if __name__ == "__main__":
    B, N, C, SL, H, W = 2, 2, 3, 8, 64, 64
    key = jax.random.PRNGKey(0)
    block = jax.random.normal(key, (B, N, C, SL, H, W), dtype=jnp.float32)

    model = ModelVisualizePallas(sample_size=H, num_seq=N, seq_len=SL,
                                 in_channels=C, feature_size=128)
    out = jax.block_until_ready(model.forward(block))
    assert out.shape == (B, N, model.feature_size), out.shape

    ref = _reference(block, model)
    assert jnp.allclose(out, ref, rtol=1e-3, atol=1e-4), (
        "mismatch vs jnp reference, max abs err = %g"
        % float(jnp.max(jnp.abs(out - ref))))
    print("KERNEL_OK")
</pallas_src>

<mosaic_0001>
module attributes {stable_mosaic.version = 11 : i64} {
  func.func @_fused_kernel(%arg0: i32, %arg1: memref<6x4x32x128xf32, #tpu.memory_space<vmem>>, %arg2: memref<384x256xf32, #tpu.memory_space<vmem>>, %arg3: memref<1x256xf32, #tpu.memory_space<vmem>>, %arg4: memref<1x1x128xf32, #tpu.memory_space<vmem>>) attributes {dimension_semantics = [#tpu.dimension_semantics<parallel>], iteration_bounds = array<i64: 4>, scalar_prefetch = 0 : i64, scratch_operands = 0 : i64, tpu.core_type = #tpu.core_type<tc>, window_params = [{transform_indices = @transform_0, window_bounds = array<i64: 6, 4, 32, 128>}, {pipeline_mode = #tpu.pipeline_mode<synchronous>, transform_indices = @transform_1, window_bounds = array<i64: 384, 256>}, {pipeline_mode = #tpu.pipeline_mode<synchronous>, transform_indices = @transform_2, window_bounds = array<i64: 1, 256>}, {transform_indices = @transform_3, window_bounds = array<i64: 1, 1, 128>}]} {
    %c0 = arith.constant 0 : index
    %c0_0 = arith.constant 0 : index
    %c0_1 = arith.constant 0 : index
    %c0_2 = arith.constant 0 : index
    %0 = vector.load %arg1[%c0, %c0_0, %c0_1, %c0_2] : memref<6x4x32x128xf32, #tpu.memory_space<vmem>>, vector<6x4x32x128xf32>
    %cst = arith.constant dense<0.000000e+00> : vector<6x32x128xf32>
    %1 = vector.multi_reduction <add>, %0, %cst [1] : vector<6x4x32x128xf32> to vector<6x32x128xf32>
    %2 = vector.shape_cast %1 : vector<6x32x128xf32> to vector<3x4x16x128xf32>
    %cst_3 = arith.constant dense<0.000000e+00> : vector<3x4x128xf32>
    %3 = vector.multi_reduction <add>, %2, %cst_3 [2] : vector<3x4x16x128xf32> to vector<3x4x128xf32>
    %c0_4 = arith.constant 0 : index
    %c0_5 = arith.constant 0 : index
    %4 = vector.load %arg2[%c0_4, %c0_5] : memref<384x256xf32, #tpu.memory_space<vmem>>, vector<384x256xf32>
    %c0_6 = arith.constant 0 : index
    %c0_7 = arith.constant 0 : index
    %5 = vector.load %arg3[%c0_6, %c0_7] : memref<1x256xf32, #tpu.memory_space<vmem>>, vector<1x256xf32>
    %6 = vector.extract_strided_slice %3 {offsets = [0, 0, 0], sizes = [1, 4, 128], strides = [1, 1, 1]} : vector<3x4x128xf32> to vector<1x4x128xf32>
    %7 = vector.shape_cast %6 : vector<1x4x128xf32> to vector<4x128xf32>
    %8 = vector.extract_strided_slice %3 {offsets = [1, 0, 0], sizes = [1, 4, 128], strides = [1, 1, 1]} : vector<3x4x128xf32> to vector<1x4x128xf32>
    %9 = vector.shape_cast %8 : vector<1x4x128xf32> to vector<4x128xf32>
    %10 = vector.extract_strided_slice %3 {offsets = [2, 0, 0], sizes = [1, 4, 128], strides = [1, 1, 1]} : vector<3x4x128xf32> to vector<1x4x128xf32>
    %11 = vector.shape_cast %10 : vector<1x4x128xf32> to vector<4x128xf32>
    %12 = tpu.concatenate %7, %9, %11 in 1 : vector<4x128xf32>, vector<4x128xf32>, vector<4x128xf32> -> vector<4x384xf32>
    %cst_8 = arith.constant dense<0.000000e+00> : vector<4x256xf32>
    %13 = tpu.matmul %12, %4, %cst_8 {dimension_numbers = #tpu.dot_dimension_numbers<[1], [0], [0], [1], [0, 0, 1, 1], [], []>} : vector<4x384xf32>, vector<384x256xf32>, vector<4x256xf32> -> vector<4x256xf32>
    %14 = vector.broadcast %5 : vector<1x256xf32> to vector<4x256xf32>
    %15 = arith.addf %13, %14 : vector<4x256xf32>
    %cst_9 = arith.constant 0.000000e+00 : f32
    %16 = vector.broadcast %cst_9 : f32 to vector<4x256xf32>
    %17 = arith.maximumf %15, %16 : vector<4x256xf32>
    %cst_10 = arith.constant dense<0.000000e+00> : vector<256xf32>
    %18 = vector.multi_reduction <add>, %17, %cst_10 [0] : vector<4x256xf32> to vector<256xf32>
    %19 = vector.shape_cast %18 : vector<256xf32> to vector<1x256xf32>
    %20 = vector.extract_strided_slice %19 {offsets = [0, 0], sizes = [1, 128], strides = [1, 1]} : vector<1x256xf32> to vector<1x128xf32>
    %21 = vector.extract_strided_slice %19 {offsets = [0, 128], sizes = [1, 128], strides = [1, 1]} : vector<1x256xf32> to vector<1x128xf32>
    %22 = arith.addf %20, %21 : vector<1x128xf32>
    %cst_11 = arith.constant 1.250000e-01 : f32
    %23 = vector.broadcast %cst_11 : f32 to vector<1x128xf32>
    %24 = arith.mulf %22, %23 : vector<1x128xf32>
    %25 = vector.shape_cast %24 : vector<1x128xf32> to vector<1x1x128xf32>
    %c0_12 = arith.constant 0 : index
    %c0_13 = arith.constant 0 : index
    %c0_14 = arith.constant 0 : index
    %26 = vector.load %arg4[%c0_12, %c0_13, %c0_14] : memref<1x1x128xf32, #tpu.memory_space<vmem>>, vector<1x1x128xf32>
    tpu.vector_store %arg4[%c0_12, %c0_13, %c0_14], %25 {strides = array<i32>} : memref<1x1x128xf32, #tpu.memory_space<vmem>>, vector<1x1x128xf32>,
    return
  }
  func.func @transform_0(%arg0: i32) -> (i32, i32, i32, i32) {
    %c0_i32 = arith.constant 0 : i32
    %c0_i32_0 = arith.constant 0 : i32
    %c0_i32_1 = arith.constant 0 : i32
    %c0_i32_2 = arith.constant 0 : i32
    return %arg0, %c0_i32, %c0_i32_0, %c0_i32_1 : i32, i32, i32, i32
  }
  func.func @transform_1(%arg0: i32) -> (i32, i32) {
    %c0_i32 = arith.constant 0 : i32
    %c0_i32_0 = arith.constant 0 : i32
    %c0_i32_1 = arith.constant 0 : i32
    return %c0_i32, %c0_i32_0 : i32, i32
  }
  func.func @transform_2(%arg0: i32) -> (i32, i32) {
    %c0_i32 = arith.constant 0 : i32
    %c0_i32_0 = arith.constant 0 : i32
    %c0_i32_1 = arith.constant 0 : i32
    return %c0_i32, %c0_i32_0 : i32, i32
  }
  func.func @transform_3(%arg0: i32) -> (i32, i32, i32) {
    %c0_i32 = arith.constant 0 : i32
    %c0_i32_0 = arith.constant 0 : i32
    %c0_i32_1 = arith.constant 0 : i32
    return %arg0, %c0_i32, %c0_i32_0 : i32, i32, i32
  }
}

</mosaic_0001>

<llo_original>
// kernel: tpu_custom_call.1
$region0: #{tpu_custom_call.1}
  #allocation0 [shape = 'u32[]', space=smem, size = 0x4, offset = 0x4, fixed_abs, tag = 'smem constant byte address 0x4 - core index']
  #allocation1 [shape = 'u32[72,128]{1,0:T(1,128)}', space=vmem, size = 0x9000, scoped, tag = 'internal scratch']
  %s0 = inlined_call_operand.hbm [shape: f32[24,4,32,128], index: 0, kind: input, shape index: {}]
  %s1 = inlined_call_operand.hbm [shape: f32[384,256], index: 1, kind: input, shape index: {}]
  %s2 = inlined_call_operand.hbm [shape: f32[1,256], index: 2, kind: input, shape index: {}]
  %s3 = inlined_call_operand.hbm [shape: f32[4,1,128], index: 3, kind: output, shape index: {}]
  %s4 = sld [smem:[#allocation0]]
  $region57: #{tpu_custom_call.1} parent=0
    _
  %s6 = ssub.s32 1, %s4
  %s7 = scalar_select 0, %s6, %s4
  $region1: #{tpu_custom_call.1} parent=0
    #allocation2 [shape = 'u8[786432]{0}', space=vmem, size = 0xc0000, scoped, tag = 'input window, operand 0']
    #allocation3 [shape = 's32[2]{0}', space=sflag, size = 0x8, scoped, tag = 'scoped memory for tpu_custom_call.1']
    #allocation4 [shape = 's32[2]{0}', space=sflag, size = 0x8, scoped, tag = 'scoped memory for tpu_custom_call.1']
    #allocation5 [shape = 'u8[393216]{0}', space=vmem, size = 0x60000, scoped, tag = 'input window, operand 1, single buffered']
    #allocation6 [shape = 's32[1]{0}', space=sflag, size = 0x4, scoped, tag = 'scoped memory for tpu_custom_call.1']
    #allocation7 [shape = 'u8[1024]{0}', space=vmem, size = 0x400, scoped, tag = 'input window, operand 2, single buffered']
    #allocation8 [shape = 'u8[1024]{0}', space=vmem, size = 0x400, scoped, tag = 'output window, operand 0']
    %8 = vsyncpa [#allocation3], 0
    %s9 = scalar_lea.sflag [#allocation3], 1
    %10 = vsyncpa %s9, 0
    %11 = vsyncpa [#allocation6], 0
    %12 = vsyncpa [#allocation4], 0
    %s13 = scalar_lea.sflag [#allocation4], 1
    %14 = vsyncpa %s13, 0
    loop: start=0, step=1, limit=6
    $region2: #{tpu_custom_call.1} parent=1 // loop_pre_header
      _
    $region3: #{tpu_custom_call.1} parent=1 // loop_header
      %s16 = sphi 0, %s20
      %p17 = scmp.ge.s32.totalorder %s16, 6
      %s26 = sphi 0, %s28
      %s29 = sphi 0, %s26
      %s30 = sphi 0, %s29
      %s46 = sphi 0, %s30
      %s50 = sphi 0, %s50
      %s52 = sphi 0, %s50
      %s53 = sphi 0, %s52
      %s67 = sphi 0, %s53
      %s71 = sphi 0, %s71
      %s73 = sphi 0, %s71
      %s74 = sphi 0, %s73
      %s88 = sphi 0, %s74
      %s94 = sphi 0, %s96
      %s97 = sphi 0, %s94
      %s98 = sphi 0, %s97
      %s114 = sphi 0, %s98
    $region4: #{tpu_custom_call.1} parent=1 // loop_header_branch
      %19 = sbr.rel (%p17) target = $region8
    $region5: #{tpu_custom_call.1} parent=1 // loop_body
      %s21 = ssub.s32 %s16, 1
      %s22 = ssub.s32 %s16, 2
      %s23 = sadd.s32 %s16, 1
      %s24 = ssub.s32 %s16, %s23
      %p25 = scmp.eq.s32.totalorder %s24, 0
      %s27 = sadd.s32 %s26, 1
      %s28 = scalar_select %p25, %s26, %s27
      %p31 = pneg %p25
      %p32 = scmp.eq.s32.totalorder %s16, 3
      %p33 = por %p31, %p32
      %p34 = scmp.ne.s32.totalorder %s26, %s29
      %p35 = scmp.eq.s32.totalorder %s16, 0
      %p36 = por %p34, %p35
      %p37 = scmp.ne.s32.totalorder %s26, %s29
      %p38 = scmp.eq.s32.totalorder %s21, 3
      %p39 = por %p37, %p38
      %p40 = scmp.ne.s32.totalorder %s29, %s30
      %p41 = scmp.eq.s32.totalorder %s21, 0
      %p42 = por %p40, %p41
      %p43 = scmp.ne.s32.totalorder %s29, %s30
      %p44 = scmp.eq.s32.totalorder %s22, 3
      %p45 = por %p43, %p44
      %p47 = scmp.ne.s32.totalorder %s30, %s46
      %p48 = scmp.eq.s32.totalorder %s22, 0
      %p49 = por %p47, %p48
      %s51 = sadd.s32 %s50, 1
      %p54 = scmp.eq.s32.totalorder %s16, 3
      %p55 = scmp.ne.s32.totalorder %s50, %s52
      %p56 = scmp.eq.s32.totalorder %s16, 0
      %p57 = por %p55, %p56
      %p58 = scmp.ne.s32.totalorder %s50, %s52
      %p59 = scmp.eq.s32.totalorder %s21, 3
      %p60 = por %p58, %p59
      %p61 = scmp.ne.s32.totalorder %s52, %s53
      %p62 = scmp.eq.s32.totalorder %s21, 0
      %p63 = por %p61, %p62
      %p64 = scmp.ne.s32.totalorder %s52, %s53
      %p65 = scmp.eq.s32.totalorder %s22, 3
      %p66 = por %p64, %p65
      %p68 = scmp.ne.s32.totalorder %s53, %s67
      %p69 = scmp.eq.s32.totalorder %s22, 0
      %p70 = por %p68, %p69
      %s72 = sadd.s32 %s71, 1
      %p75 = scmp.eq.s32.totalorder %s16, 3
      %p76 = scmp.ne.s32.totalorder %s71, %s73
      %p77 = scmp.eq.s32.totalorder %s16, 0
      %p78 = por %p76, %p77
      %p79 = scmp.ne.s32.totalorder %s71, %s73
      %p80 = scmp.eq.s32.totalorder %s21, 3
      %p81 = por %p79, %p80
      %p82 = scmp.ne.s32.totalorder %s73, %s74
      %p83 = scmp.eq.s32.totalorder %s21, 0
      %p84 = por %p82, %p83
      %p85 = scmp.ne.s32.totalorder %s73, %s74
      %p86 = scmp.eq.s32.totalorder %s22, 3
      %p87 = por %p85, %p86
      %p89 = scmp.ne.s32.totalorder %s74, %s88
      %p90 = scmp.eq.s32.totalorder %s22, 0
      %p91 = por %p89, %p90
      %s92 = ssub.s32 %s16, %s23
      %p93 = scmp.eq.s32.totalorder %s92, 0
      %s95 = sadd.s32 %s94, 1
      %s96 = scalar_select %p93, %s94, %s95
      %p99 = pneg %p93
      %p100 = scmp.eq.s32.totalorder %s16, 3
      %p101 = por %p99, %p100
      %p102 = scmp.ne.s32.totalorder %s94, %s97
      %p103 = scmp.eq.s32.totalorder %s16, 0
      %p104 = por %p102, %p103
      %p105 = scmp.ne.s32.totalorder %s94, %s97
      %p106 = scmp.eq.s32.totalorder %s21, 3
      %p107 = por %p105, %p106
      %p108 = scmp.ne.s32.totalorder %s97, %s98
      %p109 = scmp.eq.s32.totalorder %s21, 0
      %p110 = por %p108, %p109
      %p111 = scmp.ne.s32.totalorder %s97, %s98
      %p112 = scmp.eq.s32.totalorder %s22, 3
      %p113 = por %p111, %p112
      %p115 = scmp.ne.s32.totalorder %s98, %s114
      %p116 = scmp.eq.s32.totalorder %s22, 0
      %p117 = por %p115, %p116
      %p118 = scmp.le.s32.totalorder 1, %s16
      %p119 = scmp.lt.s32.totalorder %s16, 5
      %p120 = pnand %p118, %p119
      %p121 = pneg %p120
      // Predicated region
      $region9: #{tpu_custom_call.1} parent=5 // pred_check
        _
      $region10: #{tpu_custom_call.1} parent=5 // pred_check_branch
        %123 = sbr.rel (%p120) target = $region12
      $region11: #{tpu_custom_call.1} parent=5 // pred_region
        %s124 = ssub.s32 %s16, 1
        // Predicated region
        $region13: #{tpu_custom_call.1} parent=11 // pred_check
          %p125 = pneg %p63
        $region14: #{tpu_custom_call.1} parent=11 // pred_check_branch
          %127 = sbr.rel (%p125) target = $region16
        $region15: #{tpu_custom_call.1} parent=11 // pred_region
          %129 = vsyncadd [#allocation6], 0
          %s130 = sshll.u32 %s1, 4
          %s131 = int_to_ptr.hbm [resolvable:$true] %s130
          %s132 = sshll.u32 [#allocation5], 4
          %s133 = int_to_ptr.vmem [resolvable:$true] %s132
          %138 = dma.hbm_to_vmem [thread:$0]  %s131, 12288, %s133, [#allocation6], 256, 256, 16
        $region16: #{tpu_custom_call.1} parent=11 // pred_fallthru
          _
        // Predicated region
        $region17: #{tpu_custom_call.1} parent=11 // pred_check
          %p139 = pneg %p84
        $region18: #{tpu_custom_call.1} parent=11 // pred_check_branch
          %141 = sbr.rel (%p139) target = $region20
        $region19: #{tpu_custom_call.1} parent=11 // pred_region
          %143 = vsyncadd [#allocation6], 0
          %s145 = sshll.u32 %s2, 4
          %s146 = int_to_ptr.hbm [resolvable:$true] %s145
          %s147 = sshll.u32 [#allocation7], 4
          %s148 = int_to_ptr.vmem [resolvable:$true] %s147
          %150 = dma.hbm_to_vmem [thread:$0]  %s146, 32, %s148, [#allocation6]
        $region20: #{tpu_custom_call.1} parent=11 // pred_fallthru
          _
      $region12: #{tpu_custom_call.1} parent=5 // pred_fallthru
        _
      %p151 = scmp.lt.s32.totalorder %s16, 4
      // Predicated region
      $region21: #{tpu_custom_call.1} parent=5 // pred_check
        %p152 = pneg %p151
      $region22: #{tpu_custom_call.1} parent=5 // pred_check_branch
        %154 = sbr.rel (%p152) target = $region24
      $region23: #{tpu_custom_call.1} parent=5 // pred_region
        // Predicated region
        $region25: #{tpu_custom_call.1} parent=23 // pred_check
          %p155 = pneg %p36
        $region26: #{tpu_custom_call.1} parent=23 // pred_check_branch
          %157 = sbr.rel (%p155) target = $region28
        $region27: #{tpu_custom_call.1} parent=23 // pred_region
          %s158 = sand.u32 %s26, 1
          %s159 = scalar_lea.sflag [#allocation3], %s158
          %s160 = sand.u32 %s26, 1
          %s161 = smul.addr %s160, 768
          %s162 = scalar_lea.vmem [#allocation2], %s161
          %s163 = smul.u32 6, %s16
          %165 = vsyncadd %s159, 0
          %s166 = smul.addr %s163, 16
          %s167 = smul.addr %s166, 8
          %s168 = scalar_lea.hbm %s0, %s167
          %s169 = sshll.u32 %s168, 4
          %s170 = int_to_ptr.hbm [resolvable:$true] %s169
          %s171 = sshll.u32 %s162, 4
          %s172 = int_to_ptr.vmem [resolvable:$true] %s171
          %177 = dma.hbm_to_vmem [thread:$0]  %s170, 12288, %s172, %s159, 128, 128, 8
        $region28: #{tpu_custom_call.1} parent=23 // pred_fallthru
          _
      $region24: #{tpu_custom_call.1} parent=5 // pred_fallthru
        _
      %p178 = scmp.le.s32.totalorder 1, %s16
      %p179 = scmp.lt.s32.totalorder %s16, 5
      %p180 = pnand %p178, %p179
      %p181 = pneg %p180
      // Predicated region
      $region29: #{tpu_custom_call.1} parent=5 // pred_check
        _
      $region30: #{tpu_custom_call.1} parent=5 // pred_check_branch
        %183 = sbr.rel (%p180) target = $region32
      $region31: #{tpu_custom_call.1} parent=5 // pred_region
        %s184 = ssub.s32 %s16, 1
        %s185 = sand.u32 %s29, 1
        %s186 = scalar_lea.sflag [#allocation3], %s185
        %s187 = sand.u32 %s29, 1
        %s188 = smul.addr %s187, 768
        %s189 = scalar_lea.vmem [#allocation2], %s188
        // Predicated region
        $region33: #{tpu_custom_call.1} parent=31 // pred_check
          %p190 = pneg %p42
        $region34: #{tpu_custom_call.1} parent=31 // pred_check_branch
          %192 = sbr.rel (%p190) target = $region36
        $region35: #{tpu_custom_call.1} parent=31 // pred_region
          %194 = dma.done %s186, 12288
        $region36: #{tpu_custom_call.1} parent=31 // pred_fallthru
          _
        // Predicated region
        $region37: #{tpu_custom_call.1} parent=31 // pred_check
          %p195 = pneg %p63
        $region38: #{tpu_custom_call.1} parent=31 // pred_check_branch
          %197 = sbr.rel (%p195) target = $region40
        $region39: #{tpu_custom_call.1} parent=31 // pred_region
          %199 = dma.done [#allocation6], 12288
        $region40: #{tpu_custom_call.1} parent=31 // pred_fallthru
          _
        // Predicated region
        $region41: #{tpu_custom_call.1} parent=31 // pred_check
          %p200 = pneg %p84
        $region42: #{tpu_custom_call.1} parent=31 // pred_check_branch
          %202 = sbr.rel (%p200) target = $region44
        $region43: #{tpu_custom_call.1} parent=31 // pred_region
          %204 = dma.done [#allocation6], 32
        $region44: #{tpu_custom_call.1} parent=31 // pred_fallthru
          _
        %s205 = sand.u32 %s29, 1
        %s206 = scalar_lea.sflag [#allocation3], %s205
        %s207 = sand.u32 %s29, 1
        %s208 = smul.addr %s207, 768
        %s209 = scalar_lea.vmem [#allocation2], %s208
        %p210 = pneg %p42
        %p211 = pneg %p39
        %p212 = pneg %p63
        %p213 = pneg %p60
        %p214 = pneg %p84
        %p215 = pneg %p81
        %p216 = pneg %p110
        %p217 = pneg %p107
        %s218 = sand.u32 %s97, 1
        %s219 = scalar_lea.sflag [#allocation4], %s218
        %s220 = sand.u32 %s97, 1
        %s221 = scalar_lea.vmem [#allocation8], %s220
        %s222 = smul.u32 6, %s21
        %v223 = vld [vmem:[%s189] sm:$0xff]
        %v224 = vld [vmem:[%s189 + $0x8] sm:$0xff]
        %v225 = vld [vmem:[%s189 + $0x10] sm:$0xff]
        %v226 = vld [vmem:[%s189 + $0x18] sm:$0xff]
        %v227 = vld [vmem:[%s189 + $0x20] sm:$0xff]
        %v228 = vld [vmem:[%s189 + $0x28] sm:$0xff]
        %v229 = vld [vmem:[%s189 + $0x30] sm:$0xff]
        %v230 = vld [vmem:[%s189 + $0x38] sm:$0xff]
        %v231 = vld [vmem:[%s189 + $0x40] sm:$0xff]
        %v232 = vld [vmem:[%s189 + $0x48] sm:$0xff]
        %v233 = vld [vmem:[%s189 + $0x50] sm:$0xff]
        %v234 = vld [vmem:[%s189 + $0x58] sm:$0xff]
        %v235 = vld [vmem:[%s189 + $0x60] sm:$0xff]
        %v236 = vld [vmem:[%s189 + $0x68] sm:$0xff]
        %v237 = vld [vmem:[%s189 + $0x70] sm:$0xff]
        %v238 = vld [vmem:[%s189 + $0x78] sm:$0xff]
        %v239 = vld [vmem:[%s189 + $0x80] sm:$0xff]
        %v240 = vld [vmem:[%s189 + $0x88] sm:$0xff]
        %v241 = vld [vmem:[%s189 + $0x90] sm:$0xff]
        %v242 = vld [vmem:[%s189 + $0x98] sm:$0xff]
        %v243 = vld [vmem:[%s189 + $0xa0] sm:$0xff]
        %v244 = vld [vmem:[%s189 + $0xa8] sm:$0xff]
        %v245 = vld [vmem:[%s189 + $0xb0] sm:$0xff]
        %v246 = vld [vmem:[%s189 + $0xb8] sm:$0xff]
        %v247 = vld [vmem:[%s189 + $0xc0] sm:$0xff]
        %v248 = vld [vmem:[%s189 + $0xc8] sm:$0xff]
        %v249 = vld [vmem:[%s189 + $0xd0] sm:$0xff]
        %v250 = vld [vmem:[%s189 + $0xd8] sm:$0xff]
        %v251 = vld [vmem:[%s189 + $0xe0] sm:$0xff]
        %v252 = vld [vmem:[%s189 + $0xe8] sm:$0xff]
        %v253 = vld [vmem:[%s189 + $0xf0] sm:$0xff]
        %v254 = vld [vmem:[%s189 + $0xf8] sm:$0xff]
        %v255 = vld [vmem:[%s189 + $0x100] sm:$0xff]
        %v256 = vld [vmem:[%s189 + $0x108] sm:$0xff]
        %v257 = vld [vmem:[%s189 + $0x110] sm:$0xff]
        %v258 = vld [vmem:[%s189 + $0x118] sm:$0xff]
        %v259 = vld [vmem:[%s189 + $0x120] sm:$0xff]
        %v260 = vld [vmem:[%s189 + $0x128] sm:$0xff]
        %v261 = vld [vmem:[%s189 + $0x130] sm:$0xff]
        %v262 = vld [vmem:[%s189 + $0x138] sm:$0xff]
        %v263 = vld [vmem:[%s189 + $0x140] sm:$0xff]
        %v264 = vld [vmem:[%s189 + $0x148] sm:$0xff]
        %v265 = vld [vmem:[%s189 + $0x150] sm:$0xff]
        %v266 = vld [vmem:[%s189 + $0x158] sm:$0xff]
        %v267 = vld [vmem:[%s189 + $0x160] sm:$0xff]
        %v268 = vld [vmem:[%s189 + $0x168] sm:$0xff]
        %v269 = vld [vmem:[%s189 + $0x170] sm:$0xff]
        %v270 = vld [vmem:[%s189 + $0x178] sm:$0xff]
        %v271 = vld [vmem:[%s189 + $0x180] sm:$0xff]
        %v272 = vld [vmem:[%s189 + $0x188] sm:$0xff]
        %v273 = vld [vmem:[%s189 + $0x190] sm:$0xff]
        %v274 = vld [vmem:[%s189 + $0x198] sm:$0xff]
        %v275 = vld [vmem:[%s189 + $0x1a0] sm:$0xff]
        %v276 = vld [vmem:[%s189 + $0x1a8] sm:$0xff]
        %v277 = vld [vmem:[%s189 + $0x1b0] sm:$0xff]
        %v278 = vld [vmem:[%s189 + $0x1b8] sm:$0xff]
        %v279 = vld [vmem:[%s189 + $0x1c0] sm:$0xff]
        %v280 = vld [vmem:[%s189 + $0x1c8] sm:$0xff]
        %v281 = vld [vmem:[%s189 + $0x1d0] sm:$0xff]
        %v282 = vld [vmem:[%s189 + $0x1d8] sm:$0xff]
        %v283 = vld [vmem:[%s189 + $0x1e0] sm:$0xff]
        %v284 = vld [vmem:[%s189 + $0x1e8] sm:$0xff]
        %v285 = vld [vmem:[%s189 + $0x1f0] sm:$0xff]
        %v286 = vld [vmem:[%s189 + $0x1f8] sm:$0xff]
        %v287 = vld [vmem:[%s189 + $0x200] sm:$0xff]
        %v288 = vld [vmem:[%s189 + $0x208] sm:$0xff]
        %v289 = vld [vmem:[%s189 + $0x210] sm:$0xff]
        %v290 = vld [vmem:[%s189 + $0x218] sm:$0xff]
        %v291 = vld [vmem:[%s189 + $0x220] sm:$0xff]
        %v292 = vld [vmem:[%s189 + $0x228] sm:$0xff]
        %v293 = vld [vmem:[%s189 + $0x230] sm:$0xff]
        %v294 = vld [vmem:[%s189 + $0x238] sm:$0xff]
        %v295 = vld [vmem:[%s189 + $0x240] sm:$0xff]
        %v296 = vld [vmem:[%s189 + $0x248] sm:$0xff]
        %v297 = vld [vmem:[%s189 + $0x250] sm:$0xff]
        %v298 = vld [vmem:[%s189 + $0x258] sm:$0xff]
        %v299 = vld [vmem:[%s189 + $0x260] sm:$0xff]
        %v300 = vld [vmem:[%s189 + $0x268] sm:$0xff]
        %v301 = vld [vmem:[%s189 + $0x270] sm:$0xff]
        %v302 = vld [vmem:[%s189 + $0x278] sm:$0xff]
        %v303 = vld [vmem:[%s189 + $0x280] sm:$0xff]
        %v304 = vld [vmem:[%s189 + $0x288] sm:$0xff]
        %v305 = vld [vmem:[%s189 + $0x290] sm:$0xff]
        %v306 = vld [vmem:[%s189 + $0x298] sm:$0xff]
        %v307 = vld [vmem:[%s189 + $0x2a0] sm:$0xff]
        %v308 = vld [vmem:[%s189 + $0x2a8] sm:$0xff]
        %v309 = vld [vmem:[%s189 + $0x2b0] sm:$0xff]
        %v310 = vld [vmem:[%s189 + $0x2b8] sm:$0xff]
        %v311 = vld [vmem:[%s189 + $0x2c0] sm:$0xff]
        %v312 = vld [vmem:[%s189 + $0x2c8] sm:$0xff]
        %v313 = vld [vmem:[%s189 + $0x2d0] sm:$0xff]
        %v314 = vld [vmem:[%s189 + $0x2d8] sm:$0xff]
        %v315 = vld [vmem:[%s189 + $0x2e0] sm:$0xff]
        %v316 = vld [vmem:[%s189 + $0x2e8] sm:$0xff]
        %v317 = vld [vmem:[%s189 + $0x2f0] sm:$0xff]
        %v318 = vld [vmem:[%s189 + $0x2f8] sm:$0xff]
        %v319 = vadd.f32 %v223, %v227
        %v320 = vadd.f32 %v319, %v231
        %v321 = vadd.f32 %v320, %v235
        %v322 = vadd.f32 %v224, %v228
        %v323 = vadd.f32 %v322, %v232
        %v324 = vadd.f32 %v323, %v236
        %v325 = vadd.f32 %v225, %v229
        %v326 = vadd.f32 %v325, %v233
        %v327 = vadd.f32 %v326, %v237
        %v328 = vadd.f32 %v226, %v230
        %v329 = vadd.f32 %v328, %v234
        %v330 = vadd.f32 %v329, %v238
        %v331 = vadd.f32 %v239, %v243
        %v332 = vadd.f32 %v331, %v247
        %v333 = vadd.f32 %v332, %v251
        %v334 = vadd.f32 %v240, %v244
        %v335 = vadd.f32 %v334, %v248
        %v336 = vadd.f32 %v335, %v252
        %v337 = vadd.f32 %v241, %v245
        %v338 = vadd.f32 %v337, %v249
        %v339 = vadd.f32 %v338, %v253
        %v340 = vadd.f32 %v242, %v246
        %v341 = vadd.f32 %v340, %v250
        %v342 = vadd.f32 %v341, %v254
        %v343 = vadd.f32 %v255, %v259
        %v344 = vadd.f32 %v343, %v263
        %v345 = vadd.f32 %v344, %v267
        %v346 = vadd.f32 %v256, %v260
        %v347 = vadd.f32 %v346, %v264
        %v348 = vadd.f32 %v347, %v268
        %v349 = vadd.f32 %v257, %v261
        %v350 = vadd.f32 %v349, %v265
        %v351 = vadd.f32 %v350, %v269
        %v352 = vadd.f32 %v258, %v262
        %v353 = vadd.f32 %v352, %v266
        %v354 = vadd.f32 %v353, %v270
        %v355 = vadd.f32 %v271, %v275
        %v356 = vadd.f32 %v355, %v279
        %v357 = vadd.f32 %v356, %v283
        %v358 = vadd.f32 %v272, %v276
        %v359 = vadd.f32 %v358, %v280
        %v360 = vadd.f32 %v359, %v284
        %v361 = vadd.f32 %v273, %v277
        %v362 = vadd.f32 %v361, %v281
        %v363 = vadd.f32 %v362, %v285
        %v364 = vadd.f32 %v274, %v278
        %v365 = vadd.f32 %v364, %v282
        %v366 = vadd.f32 %v365, %v286
        %v367 = vadd.f32 %v287, %v291
        %v368 = vadd.f32 %v367, %v295
        %v369 = vadd.f32 %v368, %v299
        %v370 = vadd.f32 %v288, %v292
        %v371 = vadd.f32 %v370, %v296
        %v372 = vadd.f32 %v371, %v300
        %v373 = vadd.f32 %v289, %v293
        %v374 = vadd.f32 %v373, %v297
        %v375 = vadd.f32 %v374, %v301
        %v376 = vadd.f32 %v290, %v294
        %v377 = vadd.f32 %v376, %v298
        %v378 = vadd.f32 %v377, %v302
        %v379 = vadd.f32 %v303, %v307
        %v380 = vadd.f32 %v379, %v311
        %v381 = vadd.f32 %v380, %v315
        %v382 = vadd.f32 %v304, %v308
        %v383 = vadd.f32 %v382, %v312
        %v384 = vadd.f32 %v383, %v316
        %v385 = vadd.f32 %v305, %v309
        %v386 = vadd.f32 %v385, %v313
        %v387 = vadd.f32 %v386, %v317
        %v388 = vadd.f32 %v306, %v310
        %v389 = vadd.f32 %v388, %v314
        %v390 = vadd.f32 %v389, %v318
        %v391 = vadd.f32 %v321, %v324
        %v392 = vrot.slane %v391, 4
        %v393 = vadd.f32 %v391, %v392
        %v394 = vrot.slane %v393, 2
        %v395 = vadd.f32 %v393, %v394
        %v396 = vrot.slane %v395, 1
        %v397 = vadd.f32 %v395, %v396
        %v398 = vadd.f32 %v327, %v330
        %v399 = vrot.slane %v398, 4
        %v400 = vadd.f32 %v398, %v399
        %v401 = vrot.slane %v400, 2
        %v402 = vadd.f32 %v400, %v401
        %v403 = vrot.slane %v402, 1
        %v404 = vadd.f32 %v402, %v403
        %v405 = vadd.f32 %v333, %v336
        %v406 = vrot.slane %v405, 4
        %v407 = vadd.f32 %v405, %v406
        %v408 = vrot.slane %v407, 2
        %v409 = vadd.f32 %v407, %v408
        %v410 = vrot.slane %v409, 1
        %v411 = vadd.f32 %v409, %v410
        %v412 = vadd.f32 %v339, %v342
        %v413 = vrot.slane %v412, 4
        %v414 = vadd.f32 %v412, %v413
        %v415 = vrot.slane %v414, 2
        %v416 = vadd.f32 %v414, %v415
        %v417 = vrot.slane %v416, 1
        %v418 = vadd.f32 %v416, %v417
        %v419 = vadd.f32 %v345, %v348
        %v420 = vrot.slane %v419, 4
        %v421 = vadd.f32 %v419, %v420
        %v422 = vrot.slane %v421, 2
        %v423 = vadd.f32 %v421, %v422
        %v424 = vrot.slane %v423, 1
        %v425 = vadd.f32 %v423, %v424
        %v426 = vadd.f32 %v351, %v354
        %v427 = vrot.slane %v426, 4
        %v428 = vadd.f32 %v426, %v427
        %v429 = vrot.slane %v428, 2
        %v430 = vadd.f32 %v428, %v429
        %v431 = vrot.slane %v430, 1
        %v432 = vadd.f32 %v430, %v431
        %v433 = vadd.f32 %v357, %v360
        %v434 = vrot.slane %v433, 4
        %v435 = vadd.f32 %v433, %v434
        %v436 = vrot.slane %v435, 2
        %v437 = vadd.f32 %v435, %v436
        %v438 = vrot.slane %v437, 1
        %v439 = vadd.f32 %v437, %v438
        %v440 = vadd.f32 %v363, %v366
        %v441 = vrot.slane %v440, 4
        %v442 = vadd.f32 %v440, %v441
        %v443 = vrot.slane %v442, 2
        %v444 = vadd.f32 %v442, %v443
        %v445 = vrot.slane %v444, 1
        %v446 = vadd.f32 %v444, %v445
        %v447 = vadd.f32 %v369, %v372
        %v448 = vrot.slane %v447, 4
        %v449 = vadd.f32 %v447, %v448
        %v450 = vrot.slane %v449, 2
        %v451 = vadd.f32 %v449, %v450
        %v452 = vrot.slane %v451, 1
        %v453 = vadd.f32 %v451, %v452
        %v454 = vadd.f32 %v375, %v378
        %v455 = vrot.slane %v454, 4
        %v456 = vadd.f32 %v454, %v455
        %v457 = vrot.slane %v456, 2
        %v458 = vadd.f32 %v456, %v457
        %v459 = vrot.slane %v458, 1
        %v460 = vadd.f32 %v458, %v459
        %v461 = vadd.f32 %v381, %v384
        %v462 = vrot.slane %v461, 4
        %v463 = vadd.f32 %v461, %v462
        %v464 = vrot.slane %v463, 2
        %v465 = vadd.f32 %v463, %v464
        %v466 = vrot.slane %v465, 1
        %v467 = vadd.f32 %v465, %v466
        %v468 = vadd.f32 %v387, %v390
        %v469 = vrot.slane %v468, 4
        %v470 = vadd.f32 %v468, %v469
        %v471 = vrot.slane %v470, 2
        %v472 = vadd.f32 %v470, %v471
        %v473 = vrot.slane %v472, 1
        %v474 = vadd.f32 %v472, %v473
        %v475 = vld [vmem:[#allocation5] sm:$0xff]
        %v476 = vld [vmem:[#allocation5 + $0x8] sm:$0xff]
        %v477 = vld [vmem:[#allocation5 + $0x10] sm:$0xff]
        %v478 = vld [vmem:[#allocation5 + $0x18] sm:$0xff]
        %v479 = vld [vmem:[#allocation5 + $0x20] sm:$0xff]
        %v480 = vld [vmem:[#allocation5 + $0x28] sm:$0xff]
        %v481 = vld [vmem:[#allocation5 + $0x30] sm:$0xff]
        %v482 = vld [vmem:[#allocation5 + $0x38] sm:$0xff]
        %v483 = vld [vmem:[#allocation5 + $0x40] sm:$0xff]
        %v484 = vld [vmem:[#allocation5 + $0x48] sm:$0xff]
        %v485 = vld [vmem:[#allocation5 + $0x50] sm:$0xff]
        %v486 = vld [vmem:[#allocation5 + $0x58] sm:$0xff]
        %v487 = vld [vmem:[#allocation5 + $0x60] sm:$0xff]
        %v488 = vld [vmem:[#allocation5 + $0x68] sm:$0xff]
        %v489 = vld [vmem:[#allocation5 + $0x70] sm:$0xff]
        %v490 = vld [vmem:[#allocation5 + $0x78] sm:$0xff]
        %v491 = vld [vmem:[#allocation5 + $0x80] sm:$0xff]
        %v492 = vld [vmem:[#allocation5 + $0x88] sm:$0xff]
        %v493 = vld [vmem:[#allocation5 + $0x90] sm:$0xff]
        %v494 = vld [vmem:[#allocation5 + $0x98] sm:$0xff]
        %v495 = vld [vmem:[#allocation5 + $0xa0] sm:$0xff]
        %v496 = vld [vmem:[#allocation5 + $0xa8] sm:$0xff]
        %v497 = vld [vmem:[#allocation5 + $0xb0] sm:$0xff]
        %v498 = vld [vmem:[#allocation5 + $0xb8] sm:$0xff]
        %v499 = vld [vmem:[#allocation5 + $0xc0] sm:$0xff]
        %v500 = vld [vmem:[#allocation5 + $0xc8] sm:$0xff]
        %v501 = vld [vmem:[#allocation5 + $0xd0] sm:$0xff]
        %v502 = vld [vmem:[#allocation5 + $0xd8] sm:$0xff]
        %v503 = vld [vmem:[#allocation5 + $0xe0] sm:$0xff]
        %v504 = vld [vmem:[#allocation5 + $0xe8] sm:$0xff]
        %v505 = vld [vmem:[#allocation5 + $0xf0] sm:$0xff]
        %v506 = vld [vmem:[#allocation5 + $0xf8] sm:$0xff]
        %v507 = vld [vmem:[#allocation5 + $0x100] sm:$0xff]
        %v508 = vld [vmem:[#allocation5 + $0x108] sm:$0xff]
        %v509 = vld [vmem:[#allocation5 + $0x110] sm:$0xff]
        %v510 = vld [vmem:[#allocation5 + $0x118] sm:$0xff]
        %v511 = vld [vmem:[#allocation5 + $0x120] sm:$0xff]
        %v512 = vld [vmem:[#allocation5 + $0x128] sm:$0xff]
        %v513 = vld [vmem:[#allocation5 + $0x130] sm:$0xff]
        %v514 = vld [vmem:[#allocation5 + $0x138] sm:$0xff]
        %v515 = vld [vmem:[#allocation5 + $0x140] sm:$0xff]
        %v516 = vld [vmem:[#allocation5 + $0x148] sm:$0xff]
        %v517 = vld [vmem:[#allocation5 + $0x150] sm:$0xff]
        %v518 = vld [vmem:[#allocation5 + $0x158] sm:$0xff]
        %v519 = vld [vmem:[#allocation5 + $0x160] sm:$0xff]
        %v520 = vld [vmem:[#allocation5 + $0x168] sm:$0xff]
        %v521 = vld [vmem:[#allocation5 + $0x170] sm:$0xff]
        %v522 = vld [vmem:[#allocation5 + $0x178] sm:$0xff]
        %v523 = vld [vmem:[#allocation5 + $0x180] sm:$0xff]
        %v524 = vld [vmem:[#allocation5 + $0x188] sm:$0xff]
        %v525 = vld [vmem:[#allocation5 + $0x190] sm:$0xff]
        %v526 = vld [vmem:[#allocation5 + $0x198] sm:$0xff]
        %v527 = vld [vmem:[#allocation5 + $0x1a0] sm:$0xff]
        %v528 = vld [vmem:[#allocation5 + $0x1a8] sm:$0xff]
        %v529 = vld [vmem:[#allocation5 + $0x1b0] sm:$0xff]
        %v530 = vld [vmem:[#allocation5 + $0x1b8] sm:$0xff]
        %v531 = vld [vmem:[#allocation5 + $0x1c0] sm:$0xff]
        %v532 = vld [vmem:[#allocation5 + $0x1c8] sm:$0xff]
        %v533 = vld [vmem:[#allocation5 + $0x1d0] sm:$0xff]
        %v534 = vld [vmem:[#allocation5 + $0x1d8] sm:$0xff]
        %v535 = vld [vmem:[#allocation5 + $0x1e0] sm:$0xff]
        %v536 = vld [vmem:[#allocation5 + $0x1e8] sm:$0xff]
        %v537 = vld [vmem:[#allocation5 + $0x1f0] sm:$0xff]
        %v538 = vld [vmem:[#allocation5 + $0x1f8] sm:$0xff]
        %v539 = vld [vmem:[#allocation5 + $0x200] sm:$0xff]
        %v540 = vld [vmem:[#allocation5 + $0x208] sm:$0xff]
        %v541 = vld [vmem:[#allocation5 + $0x210] sm:$0xff]
        %v542 = vld [vmem:[#allocation5 + $0x218] sm:$0xff]
        %v543 = vld [vmem:[#allocation5 + $0x220] sm:$0xff]
        %v544 = vld [vmem:[#allocation5 + $0x228] sm:$0xff]
        %v545 = vld [vmem:[#allocation5 + $0x230] sm:$0xff]
        %v546 = vld [vmem:[#allocation5 + $0x238] sm:$0xff]
        %v547 = vld [vmem:[#allocation5 + $0x240] sm:$0xff]
        %v548 = vld [vmem:[#allocation5 + $0x248] sm:$0xff]
        %v549 = vld [vmem:[#allocation5 + $0x250] sm:$0xff]
        %v550 = vld [vmem:[#allocation5 + $0x258] sm:$0xff]
        %v551 = vld [vmem:[#allocation5 + $0x260] sm:$0xff]
        %v552 = vld [vmem:[#allocation5 + $0x268] sm:$0xff]
        %v553 = vld [vmem:[#allocation5 + $0x270] sm:$0xff]
        %v554 = vld [vmem:[#allocation5 + $0x278] sm:$0xff]
        %v555 = vld [vmem:[#allocation5 + $0x280] sm:$0xff]
        %v556 = vld [vmem:[#allocation5 + $0x288] sm:$0xff]
        %v557 = vld [vmem:[#allocation5 + $0x290] sm:$0xff]
        %v558 = vld [vmem:[#allocation5 + $0x298] sm:$0xff]
        %v559 = vld [vmem:[#allocation5 + $0x2a0] sm:$0xff]
        %v560 = vld [vmem:[#allocation5 + $0x2a8] sm:$0xff]
        %v561 = vld [vmem:[#allocation5 + $0x2b0] sm:$0xff]
        %v562 = vld [vmem:[#allocation5 + $0x2b8] sm:$0xff]
        %v563 = vld [vmem:[#allocation5 + $0x2c0] sm:$0xff]
        %v564 = vld [vmem:[#allocation5 + $0x2c8] sm:$0xff]
        %v565 = vld [vmem:[#allocation5 + $0x2d0] sm:$0xff]
        %v566 = vld [vmem:[#allocation5 + $0x2d8] sm:$0xff]
        %v567 = vld [vmem:[#allocation5 + $0x2e0] sm:$0xff]
        %v568 = vld [vmem:[#allocation5 + $0x2e8] sm:$0xff]
        %v569 = vld [vmem:[#allocation5 + $0x2f0] sm:$0xff]
        %v570 = vld [vmem:[#allocation5 + $0x2f8] sm:$0xff]
        %v571 = vld [vmem:[#allocation7] sm:$0x3]
        %vm576 = vcmask 1041409
        %v577 = vsel %vm576, %v404, %v397
        %vm578 = vcmask 1042434
        %v579 = vsel %vm578, %v411, %v577
        %vm580 = vcmask 1043459
        %v581 = vsel %vm580, %v418, %v579
        %v587 = vsel %vm576, %v432, %v425
        %v588 = vsel %vm578, %v439, %v587
        %v589 = vsel %vm580, %v446, %v588
        %v595 = vsel %vm576, %v460, %v453
        %v596 = vsel %vm578, %v467, %v595
        %v597 = vsel %vm580, %v474, %v596
        %v600 = vperm.slane %v571, 0
        %v601 = vperm.slane %v571, 1
        %604 = vmatpush.msra.mxu0 %v505
        %605 = vmatpush.msra.mxu0 %v503
        %606 = vmatpush.msra.mxu0 %v501
        %607 = vmatpush.msra.mxu0 %v499
        %608 = vmatpush.msra.mxu0 %v497
        %609 = vmatpush.msra.mxu0 %v495
        %610 = vmatpush.msra.mxu0 %v493
        %611 = vmatpush.msra.mxu0 %v491
        %612 = vmatpush.msra.mxu0 %v489
        %613 = vmatpush.msra.mxu0 %v487
        %614 = vmatpush.msra.mxu0 %v485
        %615 = vmatpush.msra.mxu0 %v483
        %616 = vmatpush.msra.mxu0 %v481
        %617 = vmatpush.msra.mxu0 %v479
        %618 = vmatpush.msra.mxu0 %v477
        %619 = vmatpush.msra.mxu0 %v475
        %620 = vmatmul.f32.gmra.mxu0 %v581
        %v621 = vpop.f32.mrf.mxu0
        %v622 = vadd.f32 %v600, %v621
        %623 = vdwg.mxu0
        %624 = vmatpush.msra.mxu0 %v537
        %625 = vmatpush.msra.mxu0 %v535
        %626 = vmatpush.msra.mxu0 %v533
        %627 = vmatpush.msra.mxu0 %v531
        %628 = vmatpush.msra.mxu0 %v529
        %629 = vmatpush.msra.mxu0 %v527
        %630 = vmatpush.msra.mxu0 %v525
        %631 = vmatpush.msra.mxu0 %v523
        %632 = vmatpush.msra.mxu0 %v521
        %633 = vmatpush.msra.mxu0 %v519
        %634 = vmatpush.msra.mxu0 %v517
        %635 = vmatpush.msra.mxu0 %v515
        %636 = vmatpush.msra.mxu0 %v513
        %637 = vmatpush.msra.mxu0 %v511
        %638 = vmatpush.msra.mxu0 %v509
        %639 = vmatpush.msra.mxu0 %v507
        %640 = vmatmul.f32.gmra.mxu0 %v589
        %v641 = vpop.f32.mrf.mxu0
        %v642 = vadd.f32 %v622, %v641
        %643 = vdwg.mxu0
        %644 = vmatpush.msra.mxu0 %v569
        %645 = vmatpush.msra.mxu0 %v567
        %646 = vmatpush.msra.mxu0 %v565
        %647 = vmatpush.msra.mxu0 %v563
        %648 = vmatpush.msra.mxu0 %v561
        %649 = vmatpush.msra.mxu0 %v559
        %650 = vmatpush.msra.mxu0 %v557
        %651 = vmatpush.msra.mxu0 %v555
        %652 = vmatpush.msra.mxu0 %v553
        %653 = vmatpush.msra.mxu0 %v551
        %654 = vmatpush.msra.mxu0 %v549
        %655 = vmatpush.msra.mxu0 %v547
        %656 = vmatpush.msra.mxu0 %v545
        %657 = vmatpush.msra.mxu0 %v543
        %658 = vmatpush.msra.mxu0 %v541
        %659 = vmatpush.msra.mxu0 %v539
        %660 = vmatmul.f32.gmra.mxu0 %v597
        %v661 = vpop.f32.mrf.mxu0
        %v662 = vadd.f32 %v642, %v661
        %663 = vdwg.mxu0
        %664 = vmatpush.msra.mxu0 %v506
        %665 = vmatpush.msra.mxu0 %v504
        %666 = vmatpush.msra.mxu0 %v502
        %667 = vmatpush.msra.mxu0 %v500
        %668 = vmatpush.msra.mxu0 %v498
        %669 = vmatpush.msra.mxu0 %v496
        %670 = vmatpush.msra.mxu0 %v494
        %671 = vmatpush.msra.mxu0 %v492
        %672 = vmatpush.msra.mxu0 %v490
        %673 = vmatpush.msra.mxu0 %v488
        %674 = vmatpush.msra.mxu0 %v486
        %675 = vmatpush.msra.mxu0 %v484
        %676 = vmatpush.msra.mxu0 %v482
        %677 = vmatpush.msra.mxu0 %v480
        %678 = vmatpush.msra.mxu0 %v478
        %679 = vmatpush.msra.mxu0 %v476
        %680 = vmatmul.f32.gmra.mxu0 %v581
        %v681 = vpop.f32.mrf.mxu0
        %v682 = vadd.f32 %v601, %v681
        %683 = vdwg.mxu0
        %684 = vmatpush.msra.mxu0 %v538
        %685 = vmatpush.msra.mxu0 %v536
        %686 = vmatpush.msra.mxu0 %v534
        %687 = vmatpush.msra.mxu0 %v532
        %688 = vmatpush.msra.mxu0 %v530
        %689 = vmatpush.msra.mxu0 %v528
        %690 = vmatpush.msra.mxu0 %v526
        %691 = vmatpush.msra.mxu0 %v524
        %692 = vmatpush.msra.mxu0 %v522
        %693 = vmatpush.msra.mxu0 %v520
        %694 = vmatpush.msra.mxu0 %v518
        %695 = vmatpush.msra.mxu0 %v516
        %696 = vmatpush.msra.mxu0 %v514
        %697 = vmatpush.msra.mxu0 %v512
        %698 = vmatpush.msra.mxu0 %v510
        %699 = vmatpush.msra.mxu0 %v508
        %700 = vmatmul.f32.gmra.mxu0 %v589
        %v701 = vpop.f32.mrf.mxu0
        %v702 = vadd.f32 %v682, %v701
        %703 = vdwg.mxu0
        %704 = vmatpush.msra.mxu0 %v570
        %705 = vmatpush.msra.mxu0 %v568
        %706 = vmatpush.msra.mxu0 %v566
        %707 = vmatpush.msra.mxu0 %v564
        %708 = vmatpush.msra.mxu0 %v562
        %709 = vmatpush.msra.mxu0 %v560
        %710 = vmatpush.msra.mxu0 %v558
        %711 = vmatpush.msra.mxu0 %v556
        %712 = vmatpush.msra.mxu0 %v554
        %713 = vmatpush.msra.mxu0 %v552
        %714 = vmatpush.msra.mxu0 %v550
        %715 = vmatpush.msra.mxu0 %v548
        %716 = vmatpush.msra.mxu0 %v546
        %717 = vmatpush.msra.mxu0 %v544
        %718 = vmatpush.msra.mxu0 %v542
        %719 = vmatpush.msra.mxu0 %v540
        %720 = vmatmul.f32.gmra.mxu0 %v597
        %v721 = vpop.f32.mrf.mxu0
        %v722 = vadd.f32 %v702, %v721
        %723 = vdwg.mxu0
        %v724 = vmax.f32 %v662, 0.0
        %v725 = vmax.f32 %v722, 0.0
        %vm726 = vcmask 1043456
        %v727 = vsel %vm726, %v724, 0.0
        %v728 = vrot.slane %v727, 4
        %v729 = vadd.f32 %v727, %v728
        %v730 = vrot.slane %v729, 2
        %v731 = vadd.f32 %v729, %v730
        %v732 = vrot.slane %v731, 1
        %v733 = vadd.f32 %v731, %v732
        %v734 = vsel %vm726, %v725, 0.0
        %v735 = vrot.slane %v734, 4
        %v736 = vadd.f32 %v734, %v735
        %v737 = vrot.slane %v736, 2
        %v738 = vadd.f32 %v736, %v737
        %v739 = vrot.slane %v738, 1
        %v740 = vadd.f32 %v738, %v739
        %v741 = vadd.f32 %v733, %v740
        %v742 = vmul.f32 %v741, 0.125
        %743 = vst [vmem:[%s221] sm:$0x1] %v742
        %s744 = sand.u32 %s97, 1
        %s745 = scalar_lea.sflag [#allocation4], %s744
        %s746 = sand.u32 %s97, 1
        %s747 = scalar_lea.vmem [#allocation8], %s746
        // Predicated region
        $region45: #{tpu_custom_call.1} parent=31 // pred_check
          %p748 = pneg %p107
        $region46: #{tpu_custom_call.1} parent=31 // pred_check_branch
          %750 = sbr.rel (%p748) target = $region48
        $region47: #{tpu_custom_call.1} parent=31 // pred_region
          %752 = vsyncadd %s745, 0
          %s753 = scalar_lea.hbm %s3, %s21
          %s755 = sshll.u32 %s747, 4
          %s756 = int_to_ptr.vmem [resolvable:$true] %s755
          %s757 = sshll.u32 %s753, 4
          %s758 = int_to_ptr.hbm [resolvable:$true] %s757
          %760 = dma.vmem_to_hbm [thread:$0]  %s756, 16, %s758, %s745
        $region48: #{tpu_custom_call.1} parent=31 // pred_fallthru
          _
      $region32: #{tpu_custom_call.1} parent=5 // pred_fallthru
        _
      %p761 = scmp.le.s32.totalorder 2, %s16
      // Predicated region
      $region49: #{tpu_custom_call.1} parent=5 // pred_check
        %p762 = pneg %p761
      $region50: #{tpu_custom_call.1} parent=5 // pred_check_branch
        %764 = sbr.rel (%p762) target = $region52
      $region51: #{tpu_custom_call.1} parent=5 // pred_region
        %s765 = ssub.s32 %s16, 2
        // Predicated region
        $region53: #{tpu_custom_call.1} parent=51 // pred_check
          %p766 = pneg %p113
        $region54: #{tpu_custom_call.1} parent=51 // pred_check_branch
          %768 = sbr.rel (%p766) target = $region56
        $region55: #{tpu_custom_call.1} parent=51 // pred_region
          %s769 = sand.u32 %s98, 1
          %s770 = scalar_lea.sflag [#allocation4], %s769
          %s771 = sand.u32 %s98, 1
          %s772 = scalar_lea.vmem [#allocation8], %s771
          %774 = dma.done %s770, 16
        $region56: #{tpu_custom_call.1} parent=51 // pred_fallthru
          _
      $region52: #{tpu_custom_call.1} parent=5 // pred_fallthru
        _
    $region6: #{tpu_custom_call.1} parent=1 // loop_footer
      %s20 = sadd.s32 1, %s16
    $region7: #{tpu_custom_call.1} parent=1 // loop_footer_branch
      %15 = sbr.rel target = $region3
    $region8: #{tpu_custom_call.1} parent=1 // loop_exit
      _
    %775 = vsyncpa [#allocation3], 1
    %s776 = scalar_lea.sflag [#allocation3], 1
    %777 = vsyncpa %s776, 1
    %778 = vsyncpa [#allocation6], 1
    %779 = vsyncpa [#allocation4], 1
    %s780 = scalar_lea.sflag [#allocation4], 1
    %781 = vsyncpa %s780, 1

</llo_original>
